<compile_context>
chip_gen: v7x
topology: tpu7x:2x2x1
jax: 0.10.0
libtpu: 0.0.40
codegen_flags: <defaults>
</compile_context>

<pallas_src>
import jax
import jax.numpy as jnp
import numpy as np
from jax.experimental import pallas as pl
from jax.experimental.pallas import tpu as pltpu


# ------------------------------- helpers ------------------------------------

def _vmem_limit_bytes():
    """Generation-aware scoped-VMEM limit (~75% of physical, capped at 100 MiB)."""
    cap = 64 * 1024 * 1024  # conservative fallback (v7x physical VMEM)
    try:
        info = pltpu.get_tpu_info()
        cap_attr = getattr(info, "vmem_capacity_bytes", None)
        if cap_attr:
            cap = int(cap_attr)
    except Exception:
        pass
    return int(min(cap * 3 // 4, 100 * 1024 * 1024))


# ----------------------------- Pallas kernel --------------------------------

def _make_fused_attention_kernel(heads, dim_head, use_mask, compute_dtype):
    """Whole Attention forward for one block of Bt batch elements, VMEM-resident."""
    hd = heads * dim_head

    def kernel(*refs):
        if use_mask:
            (x_ref, ctx_ref, bias_ref,
             wq_ref, wk_ref, wv_ref, wo_ref, bo_ref, o_ref, ocat_ref) = refs
        else:
            (x_ref, ctx_ref,
             wq_ref, wk_ref, wv_ref, wo_ref, bo_ref, o_ref, ocat_ref) = refs
            bias_ref = None

        bt, n, dq = x_ref.shape
        _, m, dc = ctx_ref.shape

        # Flatten the batch block so the projections are big, well-filled MXU matmuls.
        xf = x_ref[...].reshape(bt * n, dq).astype(compute_dtype)
        cf = ctx_ref[...].reshape(bt * m, dc).astype(compute_dtype)

        # Projections (softmax scale pre-folded into wq in f32; accumulate in f32).
        q = jnp.dot(xf, wq_ref[...], preferred_element_type=jnp.float32)   # (bt*n, hd)
        k = jnp.dot(cf, wk_ref[...], preferred_element_type=jnp.float32)   # (bt*m, hd)
        v = jnp.dot(cf, wv_ref[...], preferred_element_type=jnp.float32)   # (bt*m, hd)

        q3 = q.reshape(bt, n, hd).astype(compute_dtype)
        k3 = k.reshape(bt, m, hd).astype(compute_dtype)
        v3 = v.reshape(bt, m, hd).astype(compute_dtype)

        bias = bias_ref[...] if use_mask else None        # (bt, 1, m) f32 additive bias

        for hh in range(heads):                            # static unrolled head loop
            lo = hh * dim_head
            qh = q3[:, :, lo:lo + dim_head]                # (bt, n, d)
            kh = k3[:, :, lo:lo + dim_head]                # (bt, m, d)
            vh = v3[:, :, lo:lo + dim_head]                # (bt, m, d)

            # Batched QK^T over the batch-block axis; contraction on last axes (no .T).
            s = jnp.einsum('bid,bjd->bij', qh, kh,
                           preferred_element_type=jnp.float32)             # (bt, n, m)
            if use_mask:
                s = s + bias                               # 0 / -finfo(f32).max bias

            # Numerically-stable softmax in f32; normalization deferred past the
            # PV matmul so the divide touches (n, d), not (n, m).
            mx = jnp.max(s, axis=-1, keepdims=True)
            p = jnp.exp(s - mx)
            l = jnp.sum(p, axis=-1, keepdims=True)
            oh = jnp.einsum('bij,bjd->bid', p.astype(compute_dtype), vh,
                            preferred_element_type=jnp.float32)            # (bt, n, d)
            oh = oh / l
            # dropout(p=0.0) on attention weights is the identity -> omitted.

            # Concat heads into the VMEM scratch slab (single output matmul below).
            ocat_ref[:, :, lo:lo + dim_head] = oh.astype(compute_dtype)

        # ONE output projection over the concatenated heads + bias.
        ocat = ocat_ref[...].reshape(bt * n, hd)
        out = jnp.dot(ocat, wo_ref[...], preferred_element_type=jnp.float32)  # (bt*n, dq)
        out = out + bo_ref[...]
        o_ref[...] = out.reshape(bt, n, dq).astype(o_ref.dtype)

    return kernel


# ------------------------------ module wrapper -------------------------------

class AttentionPallas:
    """Mirror of the PyTorch Attention module (inference: dropout=0; mask supported)."""

    def __init__(self, query_dim, context_dim=None, heads=8, dim_head=64, *, key,
                 compute_dtype=jnp.bfloat16, batch_block=16):
        context_dim = context_dim if context_dim is not None else query_dim
        inner_dim = dim_head * heads
        self.heads = heads
        self.dim_head = dim_head
        self.scale = dim_head ** (-0.5)
        self.compute_dtype = compute_dtype
        self.batch_block = batch_block

        k1, k2, k3, k4 = jax.random.split(key, 4)
        # Master weights kept in f32 (PyTorch Linear layout: (out, in)).
        self.w_q = (jax.random.normal(k1, (inner_dim, query_dim), jnp.float32)
                    * (1.0 / np.sqrt(query_dim)))
        self.w_kv = (jax.random.normal(k2, (inner_dim * 2, context_dim), jnp.float32)
                     * (1.0 / np.sqrt(context_dim)))
        self.w_out = (jax.random.normal(k3, (query_dim, inner_dim), jnp.float32)
                      * (1.0 / np.sqrt(inner_dim)))
        self.b_out = jax.random.normal(k4, (query_dim,), jnp.float32) * 0.01

        # Kernel-side layouts (computed once):
        #  - (in, out) orientation so the MXU contracts without transposes,
        #  - softmax scale folded into Wq in f32 BEFORE the compute-dtype cast,
        #  - KV weights pre-split so k and v come from separate dots,
        #  - weights cast once to the MXU compute dtype (bf16 by default).
        self.wq_t = (self.w_q * self.scale).T.astype(compute_dtype)   # (query_dim, inner)
        self.wk_t = self.w_kv[:inner_dim].T.astype(compute_dtype)     # (context_dim, inner)
        self.wv_t = self.w_kv[inner_dim:].T.astype(compute_dtype)     # (context_dim, inner)
        self.wo_t = self.w_out.T.astype(compute_dtype)                # (inner, query_dim)
        self.bo = self.b_out.reshape(1, query_dim).astype(jnp.float32)

    def __call__(self, x, context=None, mask=None):
        context = x if context is None else context
        B, N, Dq = x.shape
        _, M, Dc = context.shape
        heads, d = self.heads, self.dim_head
        hd = heads * d
        use_mask = mask is not None

        bt = max(1, min(B, self.batch_block))              # batch elements per grid step
        grid = (pl.cdiv(B, bt),)

        kernel = _make_fused_attention_kernel(heads, d, use_mask, self.compute_dtype)

        in_specs = [
            pl.BlockSpec((bt, N, Dq), lambda b: (b, 0, 0)),    # x (batch block)
            pl.BlockSpec((bt, M, Dc), lambda b: (b, 0, 0)),    # context (batch block)
        ]
        args = [x, context]
        if use_mask:
            neg = -jnp.finfo(jnp.float32).max                  # torch masked_fill_(-finfo.max)
            bias = jnp.where(mask.reshape(B, 1, M), 0.0, neg).astype(jnp.float32)
            in_specs.append(pl.BlockSpec((bt, 1, M), lambda b: (b, 0, 0)))
            args.append(bias)
        # Constant weight slabs: same block every grid step, stay VMEM-resident.
        # TODO(synk): pipeline_mode=pl.Buffered(1) on these would also drop their
        # second pipeline buffer (pure VMEM saving on v7x).
        in_specs += [
            pl.BlockSpec(self.wq_t.shape, lambda b: (0, 0)),
            pl.BlockSpec(self.wk_t.shape, lambda b: (0, 0)),
            pl.BlockSpec(self.wv_t.shape, lambda b: (0, 0)),
            pl.BlockSpec(self.wo_t.shape, lambda b: (0, 0)),
            pl.BlockSpec(self.bo.shape, lambda b: (0, 0)),
        ]
        args += [self.wq_t, self.wk_t, self.wv_t, self.wo_t, self.bo]

        return pl.pallas_call(
            kernel,
            out_shape=jax.ShapeDtypeStruct((B, N, Dq), x.dtype),
            grid=grid,
            in_specs=in_specs,
            out_specs=pl.BlockSpec((bt, N, Dq), lambda b: (b, 0, 0)),
            scratch_shapes=[pltpu.VMEM((bt, N, hd), self.compute_dtype)],  # head-concat slab
            compiler_params=pltpu.CompilerParams(
                dimension_semantics=("parallel",),         # batch blocks shard across TCs (v7x)
                vmem_limit_bytes=_vmem_limit_bytes(),      # generation-aware scoped VMEM
            ),
        )(*args)


# ---------------------------- pure-JAX reference -----------------------------

def reference(mod: AttentionPallas, x, context=None, mask=None):
    B, N, _ = x.shape
    context = x if context is None else context
    M = context.shape[1]
    h, d = mod.heads, mod.dim_head
    inner = h * d
    q = x @ mod.w_q.T
    kv = context @ mod.w_kv.T
    k, v = kv[..., :inner], kv[..., inner:]

    def sh(t, seq):
        return t.reshape(B, seq, h, d).transpose(0, 2, 1, 3).reshape(B * h, seq, d)

    q, k, v = sh(q, N), sh(k, M), sh(v, M)
    sim = jnp.einsum('bid,bjd->bij', q, k) * mod.scale
    if mask is not None:
        neg = -jnp.finfo(sim.dtype).max
        mask_bh = jnp.repeat(mask, h, axis=0)[:, None, :]      # 'b j -> (b h) () j'
        sim = jnp.where(mask_bh, sim, neg)
    attn = jax.nn.softmax(sim, axis=-1)
    out = jnp.einsum('bij,bjd->bid', attn, v)
    out = out.reshape(B, h, N, d).transpose(0, 2, 1, 3).reshape(B, N, inner)
    return out @ mod.w_out.T + mod.b_out


# --------------------------------- main ---------------------------------------

if __name__ == "__main__":
    key = jax.random.PRNGKey(0)
    k1, k2, k3, k4 = jax.random.split(key, 4)

    B, N = 2, 8               # batch, latent (query) seq len
    query_dim = 32            # latent_dim
    heads, dim_head = 2, 16

    x = jax.random.normal(k2, (B, N, query_dim), jnp.float32)

    # --- latent self-attention: f32 compute path (tight check vs f32 reference) ---
    self_f32 = AttentionPallas(query_dim, heads=heads, dim_head=dim_head,
                               key=k1, compute_dtype=jnp.float32)
    y = jax.block_until_ready(self_f32(x))
    np.testing.assert_allclose(np.asarray(y), np.asarray(reference(self_f32, x)),
                               rtol=1e-4, atol=1e-4)

    # --- latent self-attention: bf16 MXU path (perf config; loose check vs f32 ref) ---
    self_bf16 = AttentionPallas(query_dim, heads=heads, dim_head=dim_head,
                                key=k1, compute_dtype=jnp.bfloat16)
    y = jax.block_until_ready(self_bf16(x))
    np.testing.assert_allclose(np.asarray(y), np.asarray(reference(self_bf16, x)),
                               rtol=5e-2, atol=5e-2)

    # --- cross-attention with a ragged-context mask (Perceiver cross block) ---
    context_dim, M = 48, 16   # queries_dim, dense-batch node count
    ctx = jax.random.normal(k4, (B, M, context_dim), jnp.float32)
    mask = jnp.arange(M)[None, :] < jnp.array([M, M - 5])[:, None]   # (B, M) bool

    cross_f32 = AttentionPallas(query_dim, context_dim=context_dim, heads=heads,
                                dim_head=dim_head, key=k3, compute_dtype=jnp.float32)
    y = jax.block_until_ready(cross_f32(x, context=ctx, mask=mask))
    np.testing.assert_allclose(np.asarray(y),
                               np.asarray(reference(cross_f32, x, context=ctx, mask=mask)),
                               rtol=1e-4, atol=1e-4)

    cross_bf16 = AttentionPallas(query_dim, context_dim=context_dim, heads=heads,
                                 dim_head=dim_head, key=k3, compute_dtype=jnp.bfloat16)
    y = jax.block_until_ready(cross_bf16(x, context=ctx, mask=mask))
    np.testing.assert_allclose(np.asarray(y),
                               np.asarray(reference(cross_bf16, x, context=ctx, mask=mask)),
                               rtol=5e-2, atol=5e-2)

    print("KERNEL_OK")
</pallas_src>

<mosaic_0001>
module attributes {stable_mosaic.version = 11 : i64} {
  func.func @kernel(%arg0: i32, %arg1: memref<2x8x32xf32, #tpu.memory_space<vmem>>, %arg2: memref<2x8x32xf32, #tpu.memory_space<vmem>>, %arg3: memref<32x32xf32, #tpu.memory_space<vmem>>, %arg4: memref<32x32xf32, #tpu.memory_space<vmem>>, %arg5: memref<32x32xf32, #tpu.memory_space<vmem>>, %arg6: memref<32x32xf32, #tpu.memory_space<vmem>>, %arg7: memref<1x32xf32, #tpu.memory_space<vmem>>, %arg8: memref<2x8x32xf32, #tpu.memory_space<vmem>>, %arg9: memref<2x8x32xf32, #tpu.memory_space<vmem>>) attributes {dimension_semantics = [#tpu.dimension_semantics<parallel>], iteration_bounds = array<i64: 1>, scalar_prefetch = 0 : i64, scratch_operands = 1 : i64, tpu.core_type = #tpu.core_type<tc>, window_params = [{transform_indices = @transform_0, window_bounds = array<i64: 2, 8, 32>}, {transform_indices = @transform_1, window_bounds = array<i64: 2, 8, 32>}, {pipeline_mode = #tpu.pipeline_mode<synchronous>, transform_indices = @transform_2, window_bounds = array<i64: 32, 32>}, {pipeline_mode = #tpu.pipeline_mode<synchronous>, transform_indices = @transform_3, window_bounds = array<i64: 32, 32>}, {pipeline_mode = #tpu.pipeline_mode<synchronous>, transform_indices = @transform_4, window_bounds = array<i64: 32, 32>}, {pipeline_mode = #tpu.pipeline_mode<synchronous>, transform_indices = @transform_5, window_bounds = array<i64: 32, 32>}, {pipeline_mode = #tpu.pipeline_mode<synchronous>, transform_indices = @transform_6, window_bounds = array<i64: 1, 32>}, {transform_indices = @transform_7, window_bounds = array<i64: 2, 8, 32>}]} {
    %c0 = arith.constant 0 : index
    %c0_0 = arith.constant 0 : index
    %c0_1 = arith.constant 0 : index
    %0 = vector.load %arg1[%c0, %c0_0, %c0_1] : memref<2x8x32xf32, #tpu.memory_space<vmem>>, vector<2x8x32xf32>
    %1 = vector.shape_cast %0 : vector<2x8x32xf32> to vector<16x32xf32>
    %c0_2 = arith.constant 0 : index
    %c0_3 = arith.constant 0 : index
    %c0_4 = arith.constant 0 : index
    %2 = vector.load %arg2[%c0_2, %c0_3, %c0_4] : memref<2x8x32xf32, #tpu.memory_space<vmem>>, vector<2x8x32xf32>
    %3 = vector.shape_cast %2 : vector<2x8x32xf32> to vector<16x32xf32>
    %c0_5 = arith.constant 0 : index
    %c0_6 = arith.constant 0 : index
    %4 = vector.load %arg3[%c0_5, %c0_6] : memref<32x32xf32, #tpu.memory_space<vmem>>, vector<32x32xf32>
    %cst = arith.constant dense<0.000000e+00> : vector<16x32xf32>
    %5 = tpu.matmul %1, %4, %cst {dimension_numbers = #tpu.dot_dimension_numbers<[1], [0], [0], [1], [0, 0, 1, 1], [], []>} : vector<16x32xf32>, vector<32x32xf32>, vector<16x32xf32> -> vector<16x32xf32>
    %c0_7 = arith.constant 0 : index
    %c0_8 = arith.constant 0 : index
    %6 = vector.load %arg4[%c0_7, %c0_8] : memref<32x32xf32, #tpu.memory_space<vmem>>, vector<32x32xf32>
    %cst_9 = arith.constant dense<0.000000e+00> : vector<16x32xf32>
    %7 = tpu.matmul %3, %6, %cst_9 {dimension_numbers = #tpu.dot_dimension_numbers<[1], [0], [0], [1], [0, 0, 1, 1], [], []>} : vector<16x32xf32>, vector<32x32xf32>, vector<16x32xf32> -> vector<16x32xf32>
    %c0_10 = arith.constant 0 : index
    %c0_11 = arith.constant 0 : index
    %8 = vector.load %arg5[%c0_10, %c0_11] : memref<32x32xf32, #tpu.memory_space<vmem>>, vector<32x32xf32>
    %cst_12 = arith.constant dense<0.000000e+00> : vector<16x32xf32>
    %9 = tpu.matmul %3, %8, %cst_12 {dimension_numbers = #tpu.dot_dimension_numbers<[1], [0], [0], [1], [0, 0, 1, 1], [], []>} : vector<16x32xf32>, vector<32x32xf32>, vector<16x32xf32> -> vector<16x32xf32>
    %10 = vector.shape_cast %5 : vector<16x32xf32> to vector<2x8x32xf32>
    %11 = vector.shape_cast %7 : vector<16x32xf32> to vector<2x8x32xf32>
    %12 = vector.shape_cast %9 : vector<16x32xf32> to vector<2x8x32xf32>
    %13 = vector.extract_strided_slice %10 {offsets = [0, 0, 0], sizes = [2, 8, 16], strides = [1, 1, 1]} : vector<2x8x32xf32> to vector<2x8x16xf32>
    %14 = vector.extract_strided_slice %11 {offsets = [0, 0, 0], sizes = [2, 8, 16], strides = [1, 1, 1]} : vector<2x8x32xf32> to vector<2x8x16xf32>
    %15 = vector.extract_strided_slice %12 {offsets = [0, 0, 0], sizes = [2, 8, 16], strides = [1, 1, 1]} : vector<2x8x32xf32> to vector<2x8x16xf32>
    "tpu.trace_start"() <{level = 10 : i32, message = "bid,bjd->bij"}> : () -> ()
    %cst_13 = arith.constant dense<0.000000e+00> : vector<2x8x8xf32>
    %16 = tpu.matmul %13, %14, %cst_13 {dimension_numbers = #tpu.dot_dimension_numbers<[2], [2], [1], [1], [0, 0, 0, 1, 1, 1], [0], [0]>} : vector<2x8x16xf32>, vector<2x8x16xf32>, vector<2x8x8xf32> -> vector<2x8x8xf32>
    "tpu.trace_stop"() : () -> ()
    %cst_14 = arith.constant dense<0xFF800000> : vector<2x8xf32>
    %17 = vector.multi_reduction <maximumf>, %16, %cst_14 [2] : vector<2x8x8xf32> to vector<2x8xf32>
    %18 = vector.shape_cast %17 : vector<2x8xf32> to vector<2x8x1xf32>
    %19 = vector.broadcast %18 : vector<2x8x1xf32> to vector<2x8x8xf32>
    %20 = arith.subf %16, %19 : vector<2x8x8xf32>
    %21 = math.exp %20 : vector<2x8x8xf32>
    %cst_15 = arith.constant dense<0.000000e+00> : vector<2x8xf32>
    %22 = vector.multi_reduction <add>, %21, %cst_15 [2] : vector<2x8x8xf32> to vector<2x8xf32>
    %23 = vector.shape_cast %22 : vector<2x8xf32> to vector<2x8x1xf32>
    "tpu.trace_start"() <{level = 10 : i32, message = "bij,bjd->bid"}> : () -> ()
    %cst_16 = arith.constant dense<0.000000e+00> : vector<2x8x16xf32>
    %24 = tpu.matmul %21, %15, %cst_16 {dimension_numbers = #tpu.dot_dimension_numbers<[2], [1], [1], [2], [0, 0, 0, 1, 1, 2], [0], [0]>} : vector<2x8x8xf32>, vector<2x8x16xf32>, vector<2x8x16xf32> -> vector<2x8x16xf32>
    "tpu.trace_stop"() : () -> ()
    %25 = vector.broadcast %23 : vector<2x8x1xf32> to vector<2x8x16xf32>
    %26 = arith.divf %24, %25 : vector<2x8x16xf32>
    %c0_17 = arith.constant 0 : index
    %c0_18 = arith.constant 0 : index
    %c0_19 = arith.constant 0 : index
    %27 = vector.load %arg9[%c0_17, %c0_18, %c0_19] : memref<2x8x32xf32, #tpu.memory_space<vmem>>, vector<2x8x16xf32>
    tpu.vector_store %arg9[%c0_17, %c0_18, %c0_19], %26 {strides = array<i32>} : memref<2x8x32xf32, #tpu.memory_space<vmem>>, vector<2x8x16xf32>,
    %28 = vector.extract_strided_slice %10 {offsets = [0, 0, 16], sizes = [2, 8, 16], strides = [1, 1, 1]} : vector<2x8x32xf32> to vector<2x8x16xf32>
    %29 = vector.extract_strided_slice %11 {offsets = [0, 0, 16], sizes = [2, 8, 16], strides = [1, 1, 1]} : vector<2x8x32xf32> to vector<2x8x16xf32>
    %30 = vector.extract_strided_slice %12 {offsets = [0, 0, 16], sizes = [2, 8, 16], strides = [1, 1, 1]} : vector<2x8x32xf32> to vector<2x8x16xf32>
    "tpu.trace_start"() <{level = 10 : i32, message = "bid,bjd->bij"}> : () -> ()
    %cst_20 = arith.constant dense<0.000000e+00> : vector<2x8x8xf32>
    %31 = tpu.matmul %28, %29, %cst_20 {dimension_numbers = #tpu.dot_dimension_numbers<[2], [2], [1], [1], [0, 0, 0, 1, 1, 1], [0], [0]>} : vector<2x8x16xf32>, vector<2x8x16xf32>, vector<2x8x8xf32> -> vector<2x8x8xf32>
    "tpu.trace_stop"() : () -> ()
    %cst_21 = arith.constant dense<0xFF800000> : vector<2x8xf32>
    %32 = vector.multi_reduction <maximumf>, %31, %cst_21 [2] : vector<2x8x8xf32> to vector<2x8xf32>
    %33 = vector.shape_cast %32 : vector<2x8xf32> to vector<2x8x1xf32>
    %34 = vector.broadcast %33 : vector<2x8x1xf32> to vector<2x8x8xf32>
    %35 = arith.subf %31, %34 : vector<2x8x8xf32>
    %36 = math.exp %35 : vector<2x8x8xf32>
    %cst_22 = arith.constant dense<0.000000e+00> : vector<2x8xf32>
    %37 = vector.multi_reduction <add>, %36, %cst_22 [2] : vector<2x8x8xf32> to vector<2x8xf32>
    %38 = vector.shape_cast %37 : vector<2x8xf32> to vector<2x8x1xf32>
    "tpu.trace_start"() <{level = 10 : i32, message = "bij,bjd->bid"}> : () -> ()
    %cst_23 = arith.constant dense<0.000000e+00> : vector<2x8x16xf32>
    %39 = tpu.matmul %36, %30, %cst_23 {dimension_numbers = #tpu.dot_dimension_numbers<[2], [1], [1], [2], [0, 0, 0, 1, 1, 2], [0], [0]>} : vector<2x8x8xf32>, vector<2x8x16xf32>, vector<2x8x16xf32> -> vector<2x8x16xf32>
    "tpu.trace_stop"() : () -> ()
    %40 = vector.broadcast %38 : vector<2x8x1xf32> to vector<2x8x16xf32>
    %41 = arith.divf %39, %40 : vector<2x8x16xf32>
    %c0_24 = arith.constant 0 : index
    %c0_25 = arith.constant 0 : index
    %c16 = arith.constant 16 : index
    %42 = vector.load %arg9[%c0_24, %c0_25, %c16] : memref<2x8x32xf32, #tpu.memory_space<vmem>>, vector<2x8x16xf32>
    tpu.vector_store %arg9[%c0_24, %c0_25, %c16], %41 {strides = array<i32>} : memref<2x8x32xf32, #tpu.memory_space<vmem>>, vector<2x8x16xf32>,
    %c0_26 = arith.constant 0 : index
    %c0_27 = arith.constant 0 : index
    %c0_28 = arith.constant 0 : index
    %43 = vector.load %arg9[%c0_26, %c0_27, %c0_28] : memref<2x8x32xf32, #tpu.memory_space<vmem>>, vector<2x8x32xf32>
    %44 = vector.shape_cast %43 : vector<2x8x32xf32> to vector<16x32xf32>
    %c0_29 = arith.constant 0 : index
    %c0_30 = arith.constant 0 : index
    %45 = vector.load %arg6[%c0_29, %c0_30] : memref<32x32xf32, #tpu.memory_space<vmem>>, vector<32x32xf32>
    %cst_31 = arith.constant dense<0.000000e+00> : vector<16x32xf32>
    %46 = tpu.matmul %44, %45, %cst_31 {dimension_numbers = #tpu.dot_dimension_numbers<[1], [0], [0], [1], [0, 0, 1, 1], [], []>} : vector<16x32xf32>, vector<32x32xf32>, vector<16x32xf32> -> vector<16x32xf32>
    %c0_32 = arith.constant 0 : index
    %c0_33 = arith.constant 0 : index
    %47 = vector.load %arg7[%c0_32, %c0_33] : memref<1x32xf32, #tpu.memory_space<vmem>>, vector<1x32xf32>
    %48 = vector.broadcast %47 : vector<1x32xf32> to vector<16x32xf32>
    %49 = arith.addf %46, %48 : vector<16x32xf32>
    %50 = vector.shape_cast %49 : vector<16x32xf32> to vector<2x8x32xf32>
    %c0_34 = arith.constant 0 : index
    %c0_35 = arith.constant 0 : index
    %c0_36 = arith.constant 0 : index
    %51 = vector.load %arg8[%c0_34, %c0_35, %c0_36] : memref<2x8x32xf32, #tpu.memory_space<vmem>>, vector<2x8x32xf32>
    tpu.vector_store %arg8[%c0_34, %c0_35, %c0_36], %50 {strides = array<i32>} : memref<2x8x32xf32, #tpu.memory_space<vmem>>, vector<2x8x32xf32>,
    return
  }
  func.func @transform_0(%arg0: i32) -> (i32, i32, i32) {
    %c0_i32 = arith.constant 0 : i32
    %c0_i32_0 = arith.constant 0 : i32
    %c0_i32_1 = arith.constant 0 : i32
    return %arg0, %c0_i32, %c0_i32_0 : i32, i32, i32
  }
  func.func @transform_1(%arg0: i32) -> (i32, i32, i32) {
    %c0_i32 = arith.constant 0 : i32
    %c0_i32_0 = arith.constant 0 : i32
    %c0_i32_1 = arith.constant 0 : i32
    return %arg0, %c0_i32, %c0_i32_0 : i32, i32, i32
  }
  func.func @transform_2(%arg0: i32) -> (i32, i32) {
    %c0_i32 = arith.constant 0 : i32
    %c0_i32_0 = arith.constant 0 : i32
    %c0_i32_1 = arith.constant 0 : i32
    return %c0_i32, %c0_i32_0 : i32, i32
  }
  func.func @transform_3(%arg0: i32) -> (i32, i32) {
    %c0_i32 = arith.constant 0 : i32
    %c0_i32_0 = arith.constant 0 : i32
    %c0_i32_1 = arith.constant 0 : i32
    return %c0_i32, %c0_i32_0 : i32, i32
  }
  func.func @transform_4(%arg0: i32) -> (i32, i32) {
    %c0_i32 = arith.constant 0 : i32
    %c0_i32_0 = arith.constant 0 : i32
    %c0_i32_1 = arith.constant 0 : i32
    return %c0_i32, %c0_i32_0 : i32, i32
  }
  func.func @transform_5(%arg0: i32) -> (i32, i32) {
    %c0_i32 = arith.constant 0 : i32
    %c0_i32_0 = arith.constant 0 : i32
    %c0_i32_1 = arith.constant 0 : i32
    return %c0_i32, %c0_i32_0 : i32, i32
  }
  func.func @transform_6(%arg0: i32) -> (i32, i32) {
    %c0_i32 = arith.constant 0 : i32
    %c0_i32_0 = arith.constant 0 : i32
    %c0_i32_1 = arith.constant 0 : i32
    return %c0_i32, %c0_i32_0 : i32, i32
  }
  func.func @transform_7(%arg0: i32) -> (i32, i32, i32) {
    %c0_i32 = arith.constant 0 : i32
    %c0_i32_0 = arith.constant 0 : i32
    %c0_i32_1 = arith.constant 0 : i32
    return %arg0, %c0_i32, %c0_i32_0 : i32, i32, i32
  }
}

</mosaic_0001>

<llo_original>
// kernel: tpu_custom_call.1
$region0: #{tpu_custom_call.1}
  #allocation0 [shape = 'u32[]', space=smem, size = 0x4, offset = 0x4, fixed_abs, tag = 'smem constant byte address 0x4 - core index']
  #allocation1 [shape = 'u32[144,128]{1,0:T(1,128)}', space=vmem, size = 0x12000, scoped, tag = 'internal scratch']
  #allocation2 [shape = 'f32[2,8,32]{2,1,0:T(8,128)}', space=vmem, size = 0x2000, scoped, tag = 'scratch operand']
  %s0 = inlined_call_operand.hbm [shape: f32[2,8,32], index: 0, kind: input, shape index: {}]
  %s1 = inlined_call_operand.hbm [shape: f32[2,8,32], index: 1, kind: input, shape index: {}]
  %s2 = inlined_call_operand.hbm [shape: f32[32,32], index: 2, kind: input, shape index: {}]
  %s3 = inlined_call_operand.hbm [shape: f32[32,32], index: 3, kind: input, shape index: {}]
  %s4 = inlined_call_operand.hbm [shape: f32[32,32], index: 4, kind: input, shape index: {}]
  %s5 = inlined_call_operand.hbm [shape: f32[32,32], index: 5, kind: input, shape index: {}]
  %s6 = inlined_call_operand.vmem [shape: f32[1,32], index: 6, kind: input, shape index: {}]
  %s7 = inlined_call_operand.hbm [shape: f32[2,8,32], index: 7, kind: output, shape index: {}]
  %s8 = sld [smem:[#allocation0]]
  $region62: #{tpu_custom_call.1} parent=0
    _
  %s10 = ssub.s32 1, %s8
  %s11 = scalar_select 0, %s10, %s8
  $region1: #{tpu_custom_call.1} parent=0
    #allocation3 [shape = 'u8[8192]{0}', space=vmem, size = 0x2000, scoped, tag = 'input window, operand 0, single buffered']
    #allocation4 [shape = 's32[1]{0}', space=sflag, size = 0x4, scoped, tag = 'scoped memory for tpu_custom_call.1']
    #allocation5 [shape = 's32[1]{0}', space=sflag, size = 0x4, scoped, tag = 'scoped memory for tpu_custom_call.1']
    #allocation6 [shape = 'u8[8192]{0}', space=vmem, size = 0x2000, scoped, tag = 'input window, operand 1, single buffered']
    #allocation7 [shape = 's32[1]{0}', space=sflag, size = 0x4, scoped, tag = 'scoped memory for tpu_custom_call.1']
    #allocation8 [shape = 'u8[16384]{0}', space=vmem, size = 0x4000, scoped, tag = 'input window, operand 2, single buffered']
    #allocation9 [shape = 'u8[16384]{0}', space=vmem, size = 0x4000, scoped, tag = 'input window, operand 3, single buffered']
    #allocation10 [shape = 's32[1]{0}', space=sflag, size = 0x4, scoped, tag = 'scoped memory for tpu_custom_call.1']
    #allocation11 [shape = 'u8[16384]{0}', space=vmem, size = 0x4000, scoped, tag = 'input window, operand 4, single buffered']
    #allocation12 [shape = 'u8[16384]{0}', space=vmem, size = 0x4000, scoped, tag = 'input window, operand 5, single buffered']
    #allocation13 [shape = 's32[1]{0}', space=sflag, size = 0x4, scoped, tag = 'scoped memory for tpu_custom_call.1']
    #allocation14 [shape = 'u8[8192]{0}', space=vmem, size = 0x2000, scoped, tag = 'output window, operand 0, single buffered']
    %12 = vsyncpa [#allocation4], 0
    %13 = vsyncpa [#allocation7], 0
    %14 = vsyncpa [#allocation10], 0
    %15 = vsyncpa [#allocation13], 0
    %16 = vsyncpa [#allocation5], 0
    // Predicated region
    $region2: #{tpu_custom_call.1} parent=1 // pred_check
      _
    $region3: #{tpu_custom_call.1} parent=1 // pred_check_branch
      %18 = sbr.rel (0) target = $region5
    $region4: #{tpu_custom_call.1} parent=1 // pred_region
      %s20 = ssub.s32 256, 256
      %21 = vsyncadd [#allocation4], %s20
      %s22 = sshll.u32 [#allocation3], 4
      %s23 = int_to_ptr.vmem [resolvable:$true] %s22
      %28 = dma.hbm_to_vmem [thread:$0]  %s0, 256, %s23, [#allocation4], 128, 128, 8
    $region5: #{tpu_custom_call.1} parent=1 // pred_fallthru
      _
    // Predicated region
    $region6: #{tpu_custom_call.1} parent=1 // pred_check
      _
    $region7: #{tpu_custom_call.1} parent=1 // pred_check_branch
      %30 = sbr.rel (0) target = $region9
    $region8: #{tpu_custom_call.1} parent=1 // pred_region
      %s32 = ssub.s32 256, 256
      %33 = vsyncadd [#allocation7], %s32
      %s34 = sshll.u32 [#allocation6], 4
      %s35 = int_to_ptr.vmem [resolvable:$true] %s34
      %40 = dma.hbm_to_vmem [thread:$0]  %s1, 256, %s35, [#allocation7], 128, 128, 8
    $region9: #{tpu_custom_call.1} parent=1 // pred_fallthru
      _
    // Predicated region
    $region10: #{tpu_custom_call.1} parent=1 // pred_check
      _
    $region11: #{tpu_custom_call.1} parent=1 // pred_check_branch
      %42 = sbr.rel (0) target = $region13
    $region12: #{tpu_custom_call.1} parent=1 // pred_region
      %s44 = ssub.s32 512, 512
      %45 = vsyncadd [#allocation7], %s44
      %s46 = sshll.u32 [#allocation8], 4
      %s47 = int_to_ptr.vmem [resolvable:$true] %s46
      %52 = dma.hbm_to_vmem [thread:$0]  %s2, 512, %s47, [#allocation7], 128, 128, 8
    $region13: #{tpu_custom_call.1} parent=1 // pred_fallthru
      _
    // Predicated region
    $region14: #{tpu_custom_call.1} parent=1 // pred_check
      _
    $region15: #{tpu_custom_call.1} parent=1 // pred_check_branch
      %54 = sbr.rel (0) target = $region17
    $region16: #{tpu_custom_call.1} parent=1 // pred_region
      %s56 = ssub.s32 512, 512
      %57 = vsyncadd [#allocation10], %s56
      %s58 = sshll.u32 [#allocation9], 4
      %s59 = int_to_ptr.vmem [resolvable:$true] %s58
      %64 = dma.hbm_to_vmem [thread:$0]  %s3, 512, %s59, [#allocation10], 128, 128, 8
    $region17: #{tpu_custom_call.1} parent=1 // pred_fallthru
      _
    // Predicated region
    $region18: #{tpu_custom_call.1} parent=1 // pred_check
      _
    $region19: #{tpu_custom_call.1} parent=1 // pred_check_branch
      %66 = sbr.rel (0) target = $region21
    $region20: #{tpu_custom_call.1} parent=1 // pred_region
      %s68 = ssub.s32 512, 512
      %69 = vsyncadd [#allocation10], %s68
      %s70 = sshll.u32 [#allocation11], 4
      %s71 = int_to_ptr.vmem [resolvable:$true] %s70
      %76 = dma.hbm_to_vmem [thread:$0]  %s4, 512, %s71, [#allocation10], 128, 128, 8
    $region21: #{tpu_custom_call.1} parent=1 // pred_fallthru
      _
    // Predicated region
    $region22: #{tpu_custom_call.1} parent=1 // pred_check
      _
    $region23: #{tpu_custom_call.1} parent=1 // pred_check_branch
      %78 = sbr.rel (0) target = $region25
    $region24: #{tpu_custom_call.1} parent=1 // pred_region
      %s80 = ssub.s32 512, 512
      %81 = vsyncadd [#allocation13], %s80
      %s82 = sshll.u32 [#allocation12], 4
      %s83 = int_to_ptr.vmem [resolvable:$true] %s82
      %88 = dma.hbm_to_vmem [thread:$0]  %s5, 512, %s83, [#allocation13], 128, 128, 8
    $region25: #{tpu_custom_call.1} parent=1 // pred_fallthru
      _
    // Predicated region
    $region26: #{tpu_custom_call.1} parent=1 // pred_check
      _
    $region27: #{tpu_custom_call.1} parent=1 // pred_check_branch
      %90 = sbr.rel (0) target = $region29
    $region28: #{tpu_custom_call.1} parent=1 // pred_region
      _
    $region29: #{tpu_custom_call.1} parent=1 // pred_fallthru
      _
    // Predicated region
    $region30: #{tpu_custom_call.1} parent=1 // pred_check
      _
    $region31: #{tpu_custom_call.1} parent=1 // pred_check_branch
      %92 = sbr.rel (0) target = $region33
    $region32: #{tpu_custom_call.1} parent=1 // pred_region
      %93 = dma.done [#allocation4], 256
    $region33: #{tpu_custom_call.1} parent=1 // pred_fallthru
      _
    // Predicated region
    $region34: #{tpu_custom_call.1} parent=1 // pred_check
      _
    $region35: #{tpu_custom_call.1} parent=1 // pred_check_branch
      %95 = sbr.rel (0) target = $region37
    $region36: #{tpu_custom_call.1} parent=1 // pred_region
      %96 = dma.done [#allocation7], 256
    $region37: #{tpu_custom_call.1} parent=1 // pred_fallthru
      _
    // Predicated region
    $region38: #{tpu_custom_call.1} parent=1 // pred_check
      _
    $region39: #{tpu_custom_call.1} parent=1 // pred_check_branch
      %98 = sbr.rel (0) target = $region41
    $region40: #{tpu_custom_call.1} parent=1 // pred_region
      %99 = dma.done [#allocation7], 512
    $region41: #{tpu_custom_call.1} parent=1 // pred_fallthru
      _
    // Predicated region
    $region42: #{tpu_custom_call.1} parent=1 // pred_check
      _
    $region43: #{tpu_custom_call.1} parent=1 // pred_check_branch
      %101 = sbr.rel (0) target = $region45
    $region44: #{tpu_custom_call.1} parent=1 // pred_region
      %102 = dma.done [#allocation10], 512
    $region45: #{tpu_custom_call.1} parent=1 // pred_fallthru
      _
    // Predicated region
    $region46: #{tpu_custom_call.1} parent=1 // pred_check
      _
    $region47: #{tpu_custom_call.1} parent=1 // pred_check_branch
      %104 = sbr.rel (0) target = $region49
    $region48: #{tpu_custom_call.1} parent=1 // pred_region
      %105 = dma.done [#allocation10], 512
    $region49: #{tpu_custom_call.1} parent=1 // pred_fallthru
      _
    // Predicated region
    $region50: #{tpu_custom_call.1} parent=1 // pred_check
      _
    $region51: #{tpu_custom_call.1} parent=1 // pred_check_branch
      %107 = sbr.rel (0) target = $region53
    $region52: #{tpu_custom_call.1} parent=1 // pred_region
      %108 = dma.done [#allocation13], 512
    $region53: #{tpu_custom_call.1} parent=1 // pred_fallthru
      _
    %v109 = vld [vmem:[#allocation3] sm:$0xff]
    %v110 = vld [vmem:[#allocation3 + $0x8] sm:$0xff]
    %v111 = vld [vmem:[#allocation6] sm:$0xff]
    %v112 = vld [vmem:[#allocation6 + $0x8] sm:$0xff]
    %v113 = vld [vmem:[#allocation8] sm:$0xff]
    %v114 = vld [vmem:[#allocation8 + $0x8] sm:$0xff]
    %v115 = vld [vmem:[#allocation8 + $0x10] sm:$0xff]
    %v116 = vld [vmem:[#allocation8 + $0x18] sm:$0xff]
    %vm117 = vcmask 261120
    %v119 = vsel %vm117, %v109, 0
    %v122 = vsel %vm117, %v110, 0
    %124 = vmatprep.subr.mxu0 0.0
    %125 = vmatpush1.msra.mxu0 %v113
    %126 = vmatprep.subr.mxu0 0.0
    %127 = vmatpush1.msra.mxu0 %v114
    %128 = vmatprep.subr.mxu0 0.0
    %129 = vmatpush1.msra.mxu0 %v115
    %130 = vmatprep.subr.mxu0 0.0
    %131 = vmatpush1.msra.mxu0 %v116
    %132 = vmatprep.subr.mxu0 0.0
    %133 = vmatpush1.msra.mxu0 0.0
    %134 = vmatprep.subr.mxu0 0.0
    %135 = vmatpush1.msra.mxu0 0.0
    %136 = vmatprep.subr.mxu0 0.0
    %137 = vmatpush1.msra.mxu0 0.0
    %138 = vmatprep.subr.mxu0 0.0
    %139 = vmatpush1.msra.mxu0 0.0
    %140 = vmatprep.subr.mxu0 0.0
    %141 = vmatpush1.msra.mxu0 0.0
    %142 = vmatprep.subr.mxu0 0.0
    %143 = vmatpush1.msra.mxu0 0.0
    %144 = vmatprep.subr.mxu0 0.0
    %145 = vmatpush1.msra.mxu0 0.0
    %146 = vmatprep.subr.mxu0 0.0
    %147 = vmatpush1.msra.mxu0 0.0
    %148 = vmatprep.subr.mxu0 0.0
    %149 = vmatpush1.msra.mxu0 0.0
    %150 = vmatprep.subr.mxu0 0.0
    %151 = vmatpush1.msra.mxu0 0.0
    %152 = vmatprep.subr.mxu0 0.0
    %153 = vmatpush1.msra.mxu0 0.0
    %154 = vmatprep.subr.mxu0 0.0
    %155 = vmatpush1.msra.mxu0 0.0
    %156 = vmatprep.subr.mxu0 0.0
    %157 = vmatpush1.msra.mxu0 0.0
    %158 = vmatprep.subr.mxu0 0.0
    %159 = vmatpush1.msra.mxu0 0.0
    %160 = vmatprep.subr.mxu0 0.0
    %161 = vmatpush1.msra.mxu0 0.0
    %162 = vmatprep.subr.mxu0 0.0
    %163 = vmatpush1.msra.mxu0 0.0
    %164 = vmatprep.subr.mxu0 0.0
    %165 = vmatpush1.msra.mxu0 0.0
    %166 = vmatprep.subr.mxu0 0.0
    %167 = vmatpush1.msra.mxu0 0.0
    %168 = vmatprep.subr.mxu0 0.0
    %169 = vmatpush1.msra.mxu0 0.0
    %170 = vmatprep.subr.mxu0 0.0
    %171 = vmatpush1.msra.mxu0 0.0
    %172 = vmatprep.subr.mxu0 0.0
    %173 = vmatpush1.msra.mxu0 0.0
    %174 = vmatprep.subr.mxu0 0.0
    %175 = vmatpush1.msra.mxu0 0.0
    %176 = vmatprep.subr.mxu0 0.0
    %177 = vmatpush1.msra.mxu0 0.0
    %178 = vmatprep.subr.mxu0 0.0
    %179 = vmatpush1.msra.mxu0 0.0
    %180 = vmatprep.subr.mxu0 0.0
    %181 = vmatpush1.msra.mxu0 0.0
    %182 = vmatprep.subr.mxu0 0.0
    %183 = vmatpush1.msra.mxu0 0.0
    %184 = vmatprep.subr.mxu0 0.0
    %185 = vmatpush1.msra.mxu0 0.0
    %186 = vmatprep.subr.mxu0 0.0
    %187 = vmatpush1.msra.mxu0 0.0
    %188 = vmatprep.mubr.f32.mxu0 0.0
    %189 = vmatmul.mubr.f32.gmra.mrb[0].mxu0 %v119
    %v190 = vpop.f32.mrb[0].mxu0
    %v191 = vadd.f32 0.0, %v190
    %v192 = vpop.f32.mrb[0].mxu0
    %193 = vmatprep.mubr.f32.mxu0 0.0
    %194 = vmatmul.mubr.f32.gmra.mrb[0].mxu0 %v122
    %v195 = vpop.f32.mrb[0].mxu0
    %v196 = vadd.f32 0.0, %v195
    %v197 = vpop.f32.mrb[0].mxu0
    %198 = vdwg.mxu0
    %v199 = vld [vmem:[#allocation9] sm:$0xff]
    %v200 = vld [vmem:[#allocation9 + $0x8] sm:$0xff]
    %v201 = vld [vmem:[#allocation9 + $0x10] sm:$0xff]
    %v202 = vld [vmem:[#allocation9 + $0x18] sm:$0xff]
    %v204 = vsel %vm117, %v111, 0
    %v207 = vsel %vm117, %v112, 0
    %209 = vmatprep.subr.mxu0 0.0
    %210 = vmatpush1.msra.mxu0 %v199
    %211 = vmatprep.subr.mxu0 0.0
    %212 = vmatpush1.msra.mxu0 %v200
    %213 = vmatprep.subr.mxu0 0.0
    %214 = vmatpush1.msra.mxu0 %v201
    %215 = vmatprep.subr.mxu0 0.0
    %216 = vmatpush1.msra.mxu0 %v202
    %217 = vmatprep.subr.mxu0 0.0
    %218 = vmatpush1.msra.mxu0 0.0
    %219 = vmatprep.subr.mxu0 0.0
    %220 = vmatpush1.msra.mxu0 0.0
    %221 = vmatprep.subr.mxu0 0.0
    %222 = vmatpush1.msra.mxu0 0.0
    %223 = vmatprep.subr.mxu0 0.0
    %224 = vmatpush1.msra.mxu0 0.0
    %225 = vmatprep.subr.mxu0 0.0
    %226 = vmatpush1.msra.mxu0 0.0
    %227 = vmatprep.subr.mxu0 0.0
    %228 = vmatpush1.msra.mxu0 0.0
    %229 = vmatprep.subr.mxu0 0.0
    %230 = vmatpush1.msra.mxu0 0.0
    %231 = vmatprep.subr.mxu0 0.0
    %232 = vmatpush1.msra.mxu0 0.0
    %233 = vmatprep.subr.mxu0 0.0
    %234 = vmatpush1.msra.mxu0 0.0
    %235 = vmatprep.subr.mxu0 0.0
    %236 = vmatpush1.msra.mxu0 0.0
    %237 = vmatprep.subr.mxu0 0.0
    %238 = vmatpush1.msra.mxu0 0.0
    %239 = vmatprep.subr.mxu0 0.0
    %240 = vmatpush1.msra.mxu0 0.0
    %241 = vmatprep.subr.mxu0 0.0
    %242 = vmatpush1.msra.mxu0 0.0
    %243 = vmatprep.subr.mxu0 0.0
    %244 = vmatpush1.msra.mxu0 0.0
    %245 = vmatprep.subr.mxu0 0.0
    %246 = vmatpush1.msra.mxu0 0.0
    %247 = vmatprep.subr.mxu0 0.0
    %248 = vmatpush1.msra.mxu0 0.0
    %249 = vmatprep.subr.mxu0 0.0
    %250 = vmatpush1.msra.mxu0 0.0
    %251 = vmatprep.subr.mxu0 0.0
    %252 = vmatpush1.msra.mxu0 0.0
    %253 = vmatprep.subr.mxu0 0.0
    %254 = vmatpush1.msra.mxu0 0.0
    %255 = vmatprep.subr.mxu0 0.0
    %256 = vmatpush1.msra.mxu0 0.0
    %257 = vmatprep.subr.mxu0 0.0
    %258 = vmatpush1.msra.mxu0 0.0
    %259 = vmatprep.subr.mxu0 0.0
    %260 = vmatpush1.msra.mxu0 0.0
    %261 = vmatprep.subr.mxu0 0.0
    %262 = vmatpush1.msra.mxu0 0.0
    %263 = vmatprep.subr.mxu0 0.0
    %264 = vmatpush1.msra.mxu0 0.0
    %265 = vmatprep.subr.mxu0 0.0
    %266 = vmatpush1.msra.mxu0 0.0
    %267 = vmatprep.subr.mxu0 0.0
    %268 = vmatpush1.msra.mxu0 0.0
    %269 = vmatprep.subr.mxu0 0.0
    %270 = vmatpush1.msra.mxu0 0.0
    %271 = vmatprep.subr.mxu0 0.0
    %272 = vmatpush1.msra.mxu0 0.0
    %273 = vmatprep.mubr.f32.mxu0 0.0
    %274 = vmatmul.mubr.f32.gmra.mrb[0].mxu0 %v204
    %v275 = vpop.f32.mrb[0].mxu0
    %v276 = vadd.f32 0.0, %v275
    %v277 = vpop.f32.mrb[0].mxu0
    %278 = vmatprep.mubr.f32.mxu0 0.0
    %279 = vmatmul.mubr.f32.gmra.mrb[0].mxu0 %v207
    %v280 = vpop.f32.mrb[0].mxu0
    %v281 = vadd.f32 0.0, %v280
    %v282 = vpop.f32.mrb[0].mxu0
    %283 = vdwg.mxu0
    %v284 = vld [vmem:[#allocation11] sm:$0xff]
    %v285 = vld [vmem:[#allocation11 + $0x8] sm:$0xff]
    %v286 = vld [vmem:[#allocation11 + $0x10] sm:$0xff]
    %v287 = vld [vmem:[#allocation11 + $0x18] sm:$0xff]
    %288 = vmatprep.subr.mxu0 0.0
    %289 = vmatpush1.msra.mxu0 %v284
    %290 = vmatprep.subr.mxu0 0.0
    %291 = vmatpush1.msra.mxu0 %v285
    %292 = vmatprep.subr.mxu0 0.0
    %293 = vmatpush1.msra.mxu0 %v286
    %294 = vmatprep.subr.mxu0 0.0
    %295 = vmatpush1.msra.mxu0 %v287
    %296 = vmatprep.subr.mxu0 0.0
    %297 = vmatpush1.msra.mxu0 0.0
    %298 = vmatprep.subr.mxu0 0.0
    %299 = vmatpush1.msra.mxu0 0.0
    %300 = vmatprep.subr.mxu0 0.0
    %301 = vmatpush1.msra.mxu0 0.0
    %302 = vmatprep.subr.mxu0 0.0
    %303 = vmatpush1.msra.mxu0 0.0
    %304 = vmatprep.subr.mxu0 0.0
    %305 = vmatpush1.msra.mxu0 0.0
    %306 = vmatprep.subr.mxu0 0.0
    %307 = vmatpush1.msra.mxu0 0.0
    %308 = vmatprep.subr.mxu0 0.0
    %309 = vmatpush1.msra.mxu0 0.0
    %310 = vmatprep.subr.mxu0 0.0
    %311 = vmatpush1.msra.mxu0 0.0
    %312 = vmatprep.subr.mxu0 0.0
    %313 = vmatpush1.msra.mxu0 0.0
    %314 = vmatprep.subr.mxu0 0.0
    %315 = vmatpush1.msra.mxu0 0.0
    %316 = vmatprep.subr.mxu0 0.0
    %317 = vmatpush1.msra.mxu0 0.0
    %318 = vmatprep.subr.mxu0 0.0
    %319 = vmatpush1.msra.mxu0 0.0
    %320 = vmatprep.subr.mxu0 0.0
    %321 = vmatpush1.msra.mxu0 0.0
    %322 = vmatprep.subr.mxu0 0.0
    %323 = vmatpush1.msra.mxu0 0.0
    %324 = vmatprep.subr.mxu0 0.0
    %325 = vmatpush1.msra.mxu0 0.0
    %326 = vmatprep.subr.mxu0 0.0
    %327 = vmatpush1.msra.mxu0 0.0
    %328 = vmatprep.subr.mxu0 0.0
    %329 = vmatpush1.msra.mxu0 0.0
    %330 = vmatprep.subr.mxu0 0.0
    %331 = vmatpush1.msra.mxu0 0.0
    %332 = vmatprep.subr.mxu0 0.0
    %333 = vmatpush1.msra.mxu0 0.0
    %334 = vmatprep.subr.mxu0 0.0
    %335 = vmatpush1.msra.mxu0 0.0
    %336 = vmatprep.subr.mxu0 0.0
    %337 = vmatpush1.msra.mxu0 0.0
    %338 = vmatprep.subr.mxu0 0.0
    %339 = vmatpush1.msra.mxu0 0.0
    %340 = vmatprep.subr.mxu0 0.0
    %341 = vmatpush1.msra.mxu0 0.0
    %342 = vmatprep.subr.mxu0 0.0
    %343 = vmatpush1.msra.mxu0 0.0
    %344 = vmatprep.subr.mxu0 0.0
    %345 = vmatpush1.msra.mxu0 0.0
    %346 = vmatprep.subr.mxu0 0.0
    %347 = vmatpush1.msra.mxu0 0.0
    %348 = vmatprep.subr.mxu0 0.0
    %349 = vmatpush1.msra.mxu0 0.0
    %350 = vmatprep.subr.mxu0 0.0
    %351 = vmatpush1.msra.mxu0 0.0
    %352 = vmatprep.mubr.f32.mxu0 0.0
    %353 = vmatmul.mubr.f32.gmra.mrb[0].mxu0 %v204
    %v354 = vpop.f32.mrb[0].mxu0
    %v355 = vadd.f32 0.0, %v354
    %v356 = vpop.f32.mrb[0].mxu0
    %357 = vmatprep.mubr.f32.mxu0 0.0
    %358 = vmatmul.mubr.f32.gmra.mrb[0].mxu0 %v207
    %v359 = vpop.f32.mrb[0].mxu0
    %v360 = vadd.f32 0.0, %v359
    %v361 = vpop.f32.mrb[0].mxu0
    %362 = vdwg.mxu0
    %vm363 = vcmask 130048
    %v365 = vsel %vm363, %v191, 0
    %v368 = vsel %vm363, %v276, 0
    %370 = vmatprep.subr.mxu0 0.0
    %371 = vmatpush1.xpose.msra.mxu0 %v368
    %372 = vmatprep.subr.mxu0 0.0
    %373 = vmatpush1.xpose.msra.mxu0 0.0
    %374 = vmatprep.subr.mxu0 0.0
    %375 = vmatpush1.xpose.msra.mxu0 0.0
    %376 = vmatprep.subr.mxu0 0.0
    %377 = vmatpush1.xpose.msra.mxu0 0.0
    %378 = vmatprep.subr.mxu0 0.0
    %379 = vmatpush1.xpose.msra.mxu0 0.0
    %380 = vmatprep.subr.mxu0 0.0
    %381 = vmatpush1.xpose.msra.mxu0 0.0
    %382 = vmatprep.subr.mxu0 0.0
    %383 = vmatpush1.xpose.msra.mxu0 0.0
    %384 = vmatprep.subr.mxu0 0.0
    %385 = vmatpush1.xpose.msra.mxu0 0.0
    %386 = vmatprep.subr.mxu0 0.0
    %387 = vmatpush1.xpose.msra.mxu0 0.0
    %388 = vmatprep.subr.mxu0 0.0
    %389 = vmatpush1.xpose.msra.mxu0 0.0
    %390 = vmatprep.subr.mxu0 0.0
    %391 = vmatpush1.xpose.msra.mxu0 0.0
    %392 = vmatprep.subr.mxu0 0.0
    %393 = vmatpush1.xpose.msra.mxu0 0.0
    %394 = vmatprep.subr.mxu0 0.0
    %395 = vmatpush1.xpose.msra.mxu0 0.0
    %396 = vmatprep.subr.mxu0 0.0
    %397 = vmatpush1.xpose.msra.mxu0 0.0
    %398 = vmatprep.subr.mxu0 0.0
    %399 = vmatpush1.xpose.msra.mxu0 0.0
    %400 = vmatprep.subr.mxu0 0.0
    %401 = vmatpush1.xpose.msra.mxu0 0.0
    %402 = vmatprep.subr.mxu0 0.0
    %403 = vmatpush1.xpose.msra.mxu0 0.0
    %404 = vmatprep.subr.mxu0 0.0
    %405 = vmatpush1.xpose.msra.mxu0 0.0
    %406 = vmatprep.subr.mxu0 0.0
    %407 = vmatpush1.xpose.msra.mxu0 0.0
    %408 = vmatprep.subr.mxu0 0.0
    %409 = vmatpush1.xpose.msra.mxu0 0.0
    %410 = vmatprep.subr.mxu0 0.0
    %411 = vmatpush1.xpose.msra.mxu0 0.0
    %412 = vmatprep.subr.mxu0 0.0
    %413 = vmatpush1.xpose.msra.mxu0 0.0
    %414 = vmatprep.subr.mxu0 0.0
    %415 = vmatpush1.xpose.msra.mxu0 0.0
    %416 = vmatprep.subr.mxu0 0.0
    %417 = vmatpush1.xpose.msra.mxu0 0.0
    %418 = vmatprep.subr.mxu0 0.0
    %419 = vmatpush1.xpose.msra.mxu0 0.0
    %420 = vmatprep.subr.mxu0 0.0
    %421 = vmatpush1.xpose.msra.mxu0 0.0
    %422 = vmatprep.subr.mxu0 0.0
    %423 = vmatpush1.xpose.msra.mxu0 0.0
    %424 = vmatprep.subr.mxu0 0.0
    %425 = vmatpush1.xpose.msra.mxu0 0.0
    %426 = vmatprep.subr.mxu0 0.0
    %427 = vmatpush1.xpose.msra.mxu0 0.0
    %428 = vmatprep.subr.mxu0 0.0
    %429 = vmatpush1.xpose.msra.mxu0 0.0
    %430 = vmatprep.subr.mxu0 0.0
    %431 = vmatpush1.xpose.msra.mxu0 0.0
    %432 = vmatprep.subr.mxu0 0.0
    %433 = vmatpush1.xpose.msra.mxu0 0.0
    %434 = vmatprep.mubr.f32.mxu0 0.0
    %435 = vmatmul.mubr.f32.gmra.mrb[0].mxu0 %v365
    %v436 = vpop.f32.mrb[0].mxu0
    %v437 = vadd.f32 0.0, %v436
    %v438 = vpop.f32.mrb[0].mxu0
    %439 = vdwg.mxu0
    %v441 = vsel %vm363, %v196, 0
    %v444 = vsel %vm363, %v281, 0
    %446 = vmatprep.subr.mxu0 0.0
    %447 = vmatpush1.xpose.msra.mxu0 %v444
    %448 = vmatprep.subr.mxu0 0.0
    %449 = vmatpush1.xpose.msra.mxu0 0.0
    %450 = vmatprep.subr.mxu0 0.0
    %451 = vmatpush1.xpose.msra.mxu0 0.0
    %452 = vmatprep.subr.mxu0 0.0
    %453 = vmatpush1.xpose.msra.mxu0 0.0
    %454 = vmatprep.subr.mxu0 0.0
    %455 = vmatpush1.xpose.msra.mxu0 0.0
    %456 = vmatprep.subr.mxu0 0.0
    %457 = vmatpush1.xpose.msra.mxu0 0.0
    %458 = vmatprep.subr.mxu0 0.0
    %459 = vmatpush1.xpose.msra.mxu0 0.0
    %460 = vmatprep.subr.mxu0 0.0
    %461 = vmatpush1.xpose.msra.mxu0 0.0
    %462 = vmatprep.subr.mxu0 0.0
    %463 = vmatpush1.xpose.msra.mxu0 0.0
    %464 = vmatprep.subr.mxu0 0.0
    %465 = vmatpush1.xpose.msra.mxu0 0.0
    %466 = vmatprep.subr.mxu0 0.0
    %467 = vmatpush1.xpose.msra.mxu0 0.0
    %468 = vmatprep.subr.mxu0 0.0
    %469 = vmatpush1.xpose.msra.mxu0 0.0
    %470 = vmatprep.subr.mxu0 0.0
    %471 = vmatpush1.xpose.msra.mxu0 0.0
    %472 = vmatprep.subr.mxu0 0.0
    %473 = vmatpush1.xpose.msra.mxu0 0.0
    %474 = vmatprep.subr.mxu0 0.0
    %475 = vmatpush1.xpose.msra.mxu0 0.0
    %476 = vmatprep.subr.mxu0 0.0
    %477 = vmatpush1.xpose.msra.mxu0 0.0
    %478 = vmatprep.subr.mxu0 0.0
    %479 = vmatpush1.xpose.msra.mxu0 0.0
    %480 = vmatprep.subr.mxu0 0.0
    %481 = vmatpush1.xpose.msra.mxu0 0.0
    %482 = vmatprep.subr.mxu0 0.0
    %483 = vmatpush1.xpose.msra.mxu0 0.0
    %484 = vmatprep.subr.mxu0 0.0
    %485 = vmatpush1.xpose.msra.mxu0 0.0
    %486 = vmatprep.subr.mxu0 0.0
    %487 = vmatpush1.xpose.msra.mxu0 0.0
    %488 = vmatprep.subr.mxu0 0.0
    %489 = vmatpush1.xpose.msra.mxu0 0.0
    %490 = vmatprep.subr.mxu0 0.0
    %491 = vmatpush1.xpose.msra.mxu0 0.0
    %492 = vmatprep.subr.mxu0 0.0
    %493 = vmatpush1.xpose.msra.mxu0 0.0
    %494 = vmatprep.subr.mxu0 0.0
    %495 = vmatpush1.xpose.msra.mxu0 0.0
    %496 = vmatprep.subr.mxu0 0.0
    %497 = vmatpush1.xpose.msra.mxu0 0.0
    %498 = vmatprep.subr.mxu0 0.0
    %499 = vmatpush1.xpose.msra.mxu0 0.0
    %500 = vmatprep.subr.mxu0 0.0
    %501 = vmatpush1.xpose.msra.mxu0 0.0
    %502 = vmatprep.subr.mxu0 0.0
    %503 = vmatpush1.xpose.msra.mxu0 0.0
    %504 = vmatprep.subr.mxu0 0.0
    %505 = vmatpush1.xpose.msra.mxu0 0.0
    %506 = vmatprep.subr.mxu0 0.0
    %507 = vmatpush1.xpose.msra.mxu0 0.0
    %508 = vmatprep.subr.mxu0 0.0
    %509 = vmatpush1.xpose.msra.mxu0 0.0
    %510 = vmatprep.mubr.f32.mxu0 0.0
    %511 = vmatmul.mubr.f32.gmra.mrb[0].mxu0 %v441
    %v512 = vpop.f32.mrb[0].mxu0
    %v513 = vadd.f32 0.0, %v512
    %v514 = vpop.f32.mrb[0].mxu0
    %515 = vdwg.mxu0
    %vm516 = vcmask 64512
    %v517 = vsel %vm516, %v437, -inf
    %518 = vmax.xlane.f32.xlu0 %v517
    %v519 = vpop.xlane.xlu0 %518
    %v520 = vsel %vm516, %v513, -inf
    %521 = vmax.xlane.f32.xlu0 %v520
    %v522 = vpop.xlane.xlu0 %521
    %v523 = vsub.f32 %v437, %v519
    %v524 = vsub.f32 %v513, %v522
    %v525 = vmul.f32 %v523, 1.442695
    %v526 = vpow.pop %v525
    %v527 = vmul.f32 %v524, 1.442695
    %v528 = vpow.pop %v527
    %v529 = vsel %vm516, %v526, 0.0
    %530 = vadd.xlane.f32.xlu0 %v529
    %v531 = vpop.xlane.xlu0 %530
    %v532 = vsel %vm516, %v528, 0.0
    %533 = vadd.xlane.f32.xlu0 %v532
    %v534 = vpop.xlane.xlu0 %533
    %v536 = vsel %vm516, %v526, 0
    %538 = vmatprep.subr.mxu0 0.0
    %539 = vmatpush1.msra.mxu0 %v355
    %540 = vmatprep.subr.mxu0 0.0
    %541 = vmatpush1.msra.mxu0 0.0
    %542 = vmatprep.subr.mxu0 0.0
    %543 = vmatpush1.msra.mxu0 0.0
    %544 = vmatprep.subr.mxu0 0.0
    %545 = vmatpush1.msra.mxu0 0.0
    %546 = vmatprep.subr.mxu0 0.0
    %547 = vmatpush1.msra.mxu0 0.0
    %548 = vmatprep.subr.mxu0 0.0
    %549 = vmatpush1.msra.mxu0 0.0
    %550 = vmatprep.subr.mxu0 0.0
    %551 = vmatpush1.msra.mxu0 0.0
    %552 = vmatprep.subr.mxu0 0.0
    %553 = vmatpush1.msra.mxu0 0.0
    %554 = vmatprep.subr.mxu0 0.0
    %555 = vmatpush1.msra.mxu0 0.0
    %556 = vmatprep.subr.mxu0 0.0
    %557 = vmatpush1.msra.mxu0 0.0
    %558 = vmatprep.subr.mxu0 0.0
    %559 = vmatpush1.msra.mxu0 0.0
    %560 = vmatprep.subr.mxu0 0.0
    %561 = vmatpush1.msra.mxu0 0.0
    %562 = vmatprep.subr.mxu0 0.0
    %563 = vmatpush1.msra.mxu0 0.0
    %564 = vmatprep.subr.mxu0 0.0
    %565 = vmatpush1.msra.mxu0 0.0
    %566 = vmatprep.subr.mxu0 0.0
    %567 = vmatpush1.msra.mxu0 0.0
    %568 = vmatprep.subr.mxu0 0.0
    %569 = vmatpush1.msra.mxu0 0.0
    %570 = vmatprep.subr.mxu0 0.0
    %571 = vmatpush1.msra.mxu0 0.0
    %572 = vmatprep.subr.mxu0 0.0
    %573 = vmatpush1.msra.mxu0 0.0
    %574 = vmatprep.subr.mxu0 0.0
    %575 = vmatpush1.msra.mxu0 0.0
    %576 = vmatprep.subr.mxu0 0.0
    %577 = vmatpush1.msra.mxu0 0.0
    %578 = vmatprep.subr.mxu0 0.0
    %579 = vmatpush1.msra.mxu0 0.0
    %580 = vmatprep.subr.mxu0 0.0
    %581 = vmatpush1.msra.mxu0 0.0
    %582 = vmatprep.subr.mxu0 0.0
    %583 = vmatpush1.msra.mxu0 0.0
    %584 = vmatprep.subr.mxu0 0.0
    %585 = vmatpush1.msra.mxu0 0.0
    %586 = vmatprep.subr.mxu0 0.0
    %587 = vmatpush1.msra.mxu0 0.0
    %588 = vmatprep.subr.mxu0 0.0
    %589 = vmatpush1.msra.mxu0 0.0
    %590 = vmatprep.subr.mxu0 0.0
    %591 = vmatpush1.msra.mxu0 0.0
    %592 = vmatprep.subr.mxu0 0.0
    %593 = vmatpush1.msra.mxu0 0.0
    %594 = vmatprep.subr.mxu0 0.0
    %595 = vmatpush1.msra.mxu0 0.0
    %596 = vmatprep.subr.mxu0 0.0
    %597 = vmatpush1.msra.mxu0 0.0
    %598 = vmatprep.subr.mxu0 0.0
    %599 = vmatpush1.msra.mxu0 0.0
    %600 = vmatprep.subr.mxu0 0.0
    %601 = vmatpush1.msra.mxu0 0.0
    %602 = vmatprep.mubr.f32.mxu0 0.0
    %603 = vmatmul.mubr.f32.gmra.mrb[0].mxu0 %v536
    %v604 = vpop.f32.mrb[0].mxu0
    %v605 = vadd.f32 0.0, %v604
    %v606 = vpop.f32.mrb[0].mxu0
    %607 = vdwg.mxu0
    %v609 = vsel %vm516, %v528, 0
    %611 = vmatprep.subr.mxu0 0.0
    %612 = vmatpush1.msra.mxu0 %v360
    %613 = vmatprep.subr.mxu0 0.0
    %614 = vmatpush1.msra.mxu0 0.0
    %615 = vmatprep.subr.mxu0 0.0
    %616 = vmatpush1.msra.mxu0 0.0
    %617 = vmatprep.subr.mxu0 0.0
    %618 = vmatpush1.msra.mxu0 0.0
    %619 = vmatprep.subr.mxu0 0.0
    %620 = vmatpush1.msra.mxu0 0.0
    %621 = vmatprep.subr.mxu0 0.0
    %622 = vmatpush1.msra.mxu0 0.0
    %623 = vmatprep.subr.mxu0 0.0
    %624 = vmatpush1.msra.mxu0 0.0
    %625 = vmatprep.subr.mxu0 0.0
    %626 = vmatpush1.msra.mxu0 0.0
    %627 = vmatprep.subr.mxu0 0.0
    %628 = vmatpush1.msra.mxu0 0.0
    %629 = vmatprep.subr.mxu0 0.0
    %630 = vmatpush1.msra.mxu0 0.0
    %631 = vmatprep.subr.mxu0 0.0
    %632 = vmatpush1.msra.mxu0 0.0
    %633 = vmatprep.subr.mxu0 0.0
    %634 = vmatpush1.msra.mxu0 0.0
    %635 = vmatprep.subr.mxu0 0.0
    %636 = vmatpush1.msra.mxu0 0.0
    %637 = vmatprep.subr.mxu0 0.0
    %638 = vmatpush1.msra.mxu0 0.0
    %639 = vmatprep.subr.mxu0 0.0
    %640 = vmatpush1.msra.mxu0 0.0
    %641 = vmatprep.subr.mxu0 0.0
    %642 = vmatpush1.msra.mxu0 0.0
    %643 = vmatprep.subr.mxu0 0.0
    %644 = vmatpush1.msra.mxu0 0.0
    %645 = vmatprep.subr.mxu0 0.0
    %646 = vmatpush1.msra.mxu0 0.0
    %647 = vmatprep.subr.mxu0 0.0
    %648 = vmatpush1.msra.mxu0 0.0
    %649 = vmatprep.subr.mxu0 0.0
    %650 = vmatpush1.msra.mxu0 0.0
    %651 = vmatprep.subr.mxu0 0.0
    %652 = vmatpush1.msra.mxu0 0.0
    %653 = vmatprep.subr.mxu0 0.0
    %654 = vmatpush1.msra.mxu0 0.0
    %655 = vmatprep.subr.mxu0 0.0
    %656 = vmatpush1.msra.mxu0 0.0
    %657 = vmatprep.subr.mxu0 0.0
    %658 = vmatpush1.msra.mxu0 0.0
    %659 = vmatprep.subr.mxu0 0.0
    %660 = vmatpush1.msra.mxu0 0.0
    %661 = vmatprep.subr.mxu0 0.0
    %662 = vmatpush1.msra.mxu0 0.0
    %663 = vmatprep.subr.mxu0 0.0
    %664 = vmatpush1.msra.mxu0 0.0
    %665 = vmatprep.subr.mxu0 0.0
    %666 = vmatpush1.msra.mxu0 0.0
    %667 = vmatprep.subr.mxu0 0.0
    %668 = vmatpush1.msra.mxu0 0.0
    %669 = vmatprep.subr.mxu0 0.0
    %670 = vmatpush1.msra.mxu0 0.0
    %671 = vmatprep.subr.mxu0 0.0
    %672 = vmatpush1.msra.mxu0 0.0
    %673 = vmatprep.subr.mxu0 0.0
    %674 = vmatpush1.msra.mxu0 0.0
    %675 = vmatprep.mubr.f32.mxu0 0.0
    %676 = vmatmul.mubr.f32.gmra.mrb[0].mxu0 %v609
    %v677 = vpop.f32.mrb[0].mxu0
    %v678 = vadd.f32 0.0, %v677
    %v679 = vpop.f32.mrb[0].mxu0
    %680 = vdwg.mxu0
    %v681 = vrcp.pop %v531
    %v682 = vmul.f32 %v605, %v681
    %v683 = vrcp.pop %v534
    %v684 = vmul.f32 %v678, %v683
    %685 = vst.msk [vmem:[#allocation2] sm:$0xff] %vm363, %v682
    %686 = vst.msk [vmem:[#allocation2 + $0x8] sm:$0xff] %vm363, %v684
    %687 = vrot.lane.b32.xlu0 %v191, 112
    %v688 = vpop.permute.xlu0 %687
    %689 = vrot.lane.b32.xlu0 %v276, 112
    %v690 = vpop.permute.xlu0 %689
    %v691 = vsel %vm363, %v688, 0
    %v693 = vsel %vm363, %v690, 0
    %695 = vmatprep.subr.mxu0 0.0
    %696 = vmatpush1.xpose.msra.mxu0 %v693
    %697 = vmatprep.subr.mxu0 0.0
    %698 = vmatpush1.xpose.msra.mxu0 0.0
    %699 = vmatprep.subr.mxu0 0.0
    %700 = vmatpush1.xpose.msra.mxu0 0.0
    %701 = vmatprep.subr.mxu0 0.0
    %702 = vmatpush1.xpose.msra.mxu0 0.0
    %703 = vmatprep.subr.mxu0 0.0
    %704 = vmatpush1.xpose.msra.mxu0 0.0
    %705 = vmatprep.subr.mxu0 0.0
    %706 = vmatpush1.xpose.msra.mxu0 0.0
    %707 = vmatprep.subr.mxu0 0.0
    %708 = vmatpush1.xpose.msra.mxu0 0.0
    %709 = vmatprep.subr.mxu0 0.0
    %710 = vmatpush1.xpose.msra.mxu0 0.0
    %711 = vmatprep.subr.mxu0 0.0
    %712 = vmatpush1.xpose.msra.mxu0 0.0
    %713 = vmatprep.subr.mxu0 0.0
    %714 = vmatpush1.xpose.msra.mxu0 0.0
    %715 = vmatprep.subr.mxu0 0.0
    %716 = vmatpush1.xpose.msra.mxu0 0.0
    %717 = vmatprep.subr.mxu0 0.0
    %718 = vmatpush1.xpose.msra.mxu0 0.0
    %719 = vmatprep.subr.mxu0 0.0
    %720 = vmatpush1.xpose.msra.mxu0 0.0
    %721 = vmatprep.subr.mxu0 0.0
    %722 = vmatpush1.xpose.msra.mxu0 0.0
    %723 = vmatprep.subr.mxu0 0.0
    %724 = vmatpush1.xpose.msra.mxu0 0.0
    %725 = vmatprep.subr.mxu0 0.0
    %726 = vmatpush1.xpose.msra.mxu0 0.0
    %727 = vmatprep.subr.mxu0 0.0
    %728 = vmatpush1.xpose.msra.mxu0 0.0
    %729 = vmatprep.subr.mxu0 0.0
    %730 = vmatpush1.xpose.msra.mxu0 0.0
    %731 = vmatprep.subr.mxu0 0.0
    %732 = vmatpush1.xpose.msra.mxu0 0.0
    %733 = vmatprep.subr.mxu0 0.0
    %734 = vmatpush1.xpose.msra.mxu0 0.0
    %735 = vmatprep.subr.mxu0 0.0
    %736 = vmatpush1.xpose.msra.mxu0 0.0
    %737 = vmatprep.subr.mxu0 0.0
    %738 = vmatpush1.xpose.msra.mxu0 0.0
    %739 = vmatprep.subr.mxu0 0.0
    %740 = vmatpush1.xpose.msra.mxu0 0.0
    %741 = vmatprep.subr.mxu0 0.0
    %742 = vmatpush1.xpose.msra.mxu0 0.0
    %743 = vmatprep.subr.mxu0 0.0
    %744 = vmatpush1.xpose.msra.mxu0 0.0
    %745 = vmatprep.subr.mxu0 0.0
    %746 = vmatpush1.xpose.msra.mxu0 0.0
    %747 = vmatprep.subr.mxu0 0.0
    %748 = vmatpush1.xpose.msra.mxu0 0.0
    %749 = vmatprep.subr.mxu0 0.0
    %750 = vmatpush1.xpose.msra.mxu0 0.0
    %751 = vmatprep.subr.mxu0 0.0
    %752 = vmatpush1.xpose.msra.mxu0 0.0
    %753 = vmatprep.subr.mxu0 0.0
    %754 = vmatpush1.xpose.msra.mxu0 0.0
    %755 = vmatprep.subr.mxu0 0.0
    %756 = vmatpush1.xpose.msra.mxu0 0.0
    %757 = vmatprep.subr.mxu0 0.0
    %758 = vmatpush1.xpose.msra.mxu0 0.0
    %759 = vmatprep.mubr.f32.mxu0 0.0
    %760 = vmatmul.mubr.f32.gmra.mrb[0].mxu0 %v691
    %v761 = vpop.f32.mrb[0].mxu0
    %v762 = vadd.f32 0.0, %v761
    %v763 = vpop.f32.mrb[0].mxu0
    %764 = vdwg.mxu0
    %765 = vrot.lane.b32.xlu0 %v196, 112
    %v766 = vpop.permute.xlu0 %765
    %767 = vrot.lane.b32.xlu0 %v281, 112
    %v768 = vpop.permute.xlu0 %767
    %v769 = vsel %vm363, %v766, 0
    %v771 = vsel %vm363, %v768, 0
    %773 = vmatprep.subr.mxu0 0.0
    %774 = vmatpush1.xpose.msra.mxu0 %v771
    %775 = vmatprep.subr.mxu0 0.0
    %776 = vmatpush1.xpose.msra.mxu0 0.0
    %777 = vmatprep.subr.mxu0 0.0
    %778 = vmatpush1.xpose.msra.mxu0 0.0
    %779 = vmatprep.subr.mxu0 0.0
    %780 = vmatpush1.xpose.msra.mxu0 0.0
    %781 = vmatprep.subr.mxu0 0.0
    %782 = vmatpush1.xpose.msra.mxu0 0.0
    %783 = vmatprep.subr.mxu0 0.0
    %784 = vmatpush1.xpose.msra.mxu0 0.0
    %785 = vmatprep.subr.mxu0 0.0
    %786 = vmatpush1.xpose.msra.mxu0 0.0
    %787 = vmatprep.subr.mxu0 0.0
    %788 = vmatpush1.xpose.msra.mxu0 0.0
    %789 = vmatprep.subr.mxu0 0.0
    %790 = vmatpush1.xpose.msra.mxu0 0.0
    %791 = vmatprep.subr.mxu0 0.0
    %792 = vmatpush1.xpose.msra.mxu0 0.0
    %793 = vmatprep.subr.mxu0 0.0
    %794 = vmatpush1.xpose.msra.mxu0 0.0
    %795 = vmatprep.subr.mxu0 0.0
    %796 = vmatpush1.xpose.msra.mxu0 0.0
    %797 = vmatprep.subr.mxu0 0.0
    %798 = vmatpush1.xpose.msra.mxu0 0.0
    %799 = vmatprep.subr.mxu0 0.0
    %800 = vmatpush1.xpose.msra.mxu0 0.0
    %801 = vmatprep.subr.mxu0 0.0
    %802 = vmatpush1.xpose.msra.mxu0 0.0
    %803 = vmatprep.subr.mxu0 0.0
    %804 = vmatpush1.xpose.msra.mxu0 0.0
    %805 = vmatprep.subr.mxu0 0.0
    %806 = vmatpush1.xpose.msra.mxu0 0.0
    %807 = vmatprep.subr.mxu0 0.0
    %808 = vmatpush1.xpose.msra.mxu0 0.0
    %809 = vmatprep.subr.mxu0 0.0
    %810 = vmatpush1.xpose.msra.mxu0 0.0
    %811 = vmatprep.subr.mxu0 0.0
    %812 = vmatpush1.xpose.msra.mxu0 0.0
    %813 = vmatprep.subr.mxu0 0.0
    %814 = vmatpush1.xpose.msra.mxu0 0.0
    %815 = vmatprep.subr.mxu0 0.0
    %816 = vmatpush1.xpose.msra.mxu0 0.0
    %817 = vmatprep.subr.mxu0 0.0
    %818 = vmatpush1.xpose.msra.mxu0 0.0
    %819 = vmatprep.subr.mxu0 0.0
    %820 = vmatpush1.xpose.msra.mxu0 0.0
    %821 = vmatprep.subr.mxu0 0.0
    %822 = vmatpush1.xpose.msra.mxu0 0.0
    %823 = vmatprep.subr.mxu0 0.0
    %824 = vmatpush1.xpose.msra.mxu0 0.0
    %825 = vmatprep.subr.mxu0 0.0
    %826 = vmatpush1.xpose.msra.mxu0 0.0
    %827 = vmatprep.subr.mxu0 0.0
    %828 = vmatpush1.xpose.msra.mxu0 0.0
    %829 = vmatprep.subr.mxu0 0.0
    %830 = vmatpush1.xpose.msra.mxu0 0.0
    %831 = vmatprep.subr.mxu0 0.0
    %832 = vmatpush1.xpose.msra.mxu0 0.0
    %833 = vmatprep.subr.mxu0 0.0
    %834 = vmatpush1.xpose.msra.mxu0 0.0
    %835 = vmatprep.subr.mxu0 0.0
    %836 = vmatpush1.xpose.msra.mxu0 0.0
    %837 = vmatprep.mubr.f32.mxu0 0.0
    %838 = vmatmul.mubr.f32.gmra.mrb[0].mxu0 %v769
    %v839 = vpop.f32.mrb[0].mxu0
    %v840 = vadd.f32 0.0, %v839
    %v841 = vpop.f32.mrb[0].mxu0
    %842 = vdwg.mxu0
    %v843 = vsel %vm516, %v762, -inf
    %844 = vmax.xlane.f32.xlu0 %v843
    %v845 = vpop.xlane.xlu0 %844
    %v846 = vsel %vm516, %v840, -inf
    %847 = vmax.xlane.f32.xlu0 %v846
    %v848 = vpop.xlane.xlu0 %847
    %v849 = vsub.f32 %v762, %v845
    %v850 = vsub.f32 %v840, %v848
    %v851 = vmul.f32 %v849, 1.442695
    %v852 = vpow.pop %v851
    %v853 = vmul.f32 %v850, 1.442695
    %v854 = vpow.pop %v853
    %v855 = vsel %vm516, %v852, 0.0
    %856 = vadd.xlane.f32.xlu0 %v855
    %v857 = vpop.xlane.xlu0 %856
    %v858 = vsel %vm516, %v854, 0.0
    %859 = vadd.xlane.f32.xlu0 %v858
    %v860 = vpop.xlane.xlu0 %859
    %862 = vrot.lane.b32.xlu0 %v355, 112
    %v863 = vpop.permute.xlu0 %862
    %v866 = vsel %vm516, %v852, 0
    %868 = vmatprep.subr.mxu0 0.0
    %869 = vmatpush1.msra.mxu0 %v863
    %870 = vmatprep.subr.mxu0 0.0
    %871 = vmatpush1.msra.mxu0 0.0
    %872 = vmatprep.subr.mxu0 0.0
    %873 = vmatpush1.msra.mxu0 0.0
    %874 = vmatprep.subr.mxu0 0.0
    %875 = vmatpush1.msra.mxu0 0.0
    %876 = vmatprep.subr.mxu0 0.0
    %877 = vmatpush1.msra.mxu0 0.0
    %878 = vmatprep.subr.mxu0 0.0
    %879 = vmatpush1.msra.mxu0 0.0
    %880 = vmatprep.subr.mxu0 0.0
    %881 = vmatpush1.msra.mxu0 0.0
    %882 = vmatprep.subr.mxu0 0.0
    %883 = vmatpush1.msra.mxu0 0.0
    %884 = vmatprep.subr.mxu0 0.0
    %885 = vmatpush1.msra.mxu0 0.0
    %886 = vmatprep.subr.mxu0 0.0
    %887 = vmatpush1.msra.mxu0 0.0
    %888 = vmatprep.subr.mxu0 0.0
    %889 = vmatpush1.msra.mxu0 0.0
    %890 = vmatprep.subr.mxu0 0.0
    %891 = vmatpush1.msra.mxu0 0.0
    %892 = vmatprep.subr.mxu0 0.0
    %893 = vmatpush1.msra.mxu0 0.0
    %894 = vmatprep.subr.mxu0 0.0
    %895 = vmatpush1.msra.mxu0 0.0
    %896 = vmatprep.subr.mxu0 0.0
    %897 = vmatpush1.msra.mxu0 0.0
    %898 = vmatprep.subr.mxu0 0.0
    %899 = vmatpush1.msra.mxu0 0.0
    %900 = vmatprep.subr.mxu0 0.0
    %901 = vmatpush1.msra.mxu0 0.0
    %902 = vmatprep.subr.mxu0 0.0
    %903 = vmatpush1.msra.mxu0 0.0
    %904 = vmatprep.subr.mxu0 0.0
    %905 = vmatpush1.msra.mxu0 0.0
    %906 = vmatprep.subr.mxu0 0.0
    %907 = vmatpush1.msra.mxu0 0.0
    %908 = vmatprep.subr.mxu0 0.0
    %909 = vmatpush1.msra.mxu0 0.0
    %910 = vmatprep.subr.mxu0 0.0
    %911 = vmatpush1.msra.mxu0 0.0
    %912 = vmatprep.subr.mxu0 0.0
    %913 = vmatpush1.msra.mxu0 0.0
    %914 = vmatprep.subr.mxu0 0.0
    %915 = vmatpush1.msra.mxu0 0.0
    %916 = vmatprep.subr.mxu0 0.0
    %917 = vmatpush1.msra.mxu0 0.0
    %918 = vmatprep.subr.mxu0 0.0
    %919 = vmatpush1.msra.mxu0 0.0
    %920 = vmatprep.subr.mxu0 0.0
    %921 = vmatpush1.msra.mxu0 0.0
    %922 = vmatprep.subr.mxu0 0.0
    %923 = vmatpush1.msra.mxu0 0.0
    %924 = vmatprep.subr.mxu0 0.0
    %925 = vmatpush1.msra.mxu0 0.0
    %926 = vmatprep.subr.mxu0 0.0
    %927 = vmatpush1.msra.mxu0 0.0
    %928 = vmatprep.subr.mxu0 0.0
    %929 = vmatpush1.msra.mxu0 0.0
    %930 = vmatprep.subr.mxu0 0.0
    %931 = vmatpush1.msra.mxu0 0.0
    %932 = vmatprep.mubr.f32.mxu0 0.0
    %933 = vmatmul.mubr.f32.gmra.mrb[0].mxu0 %v866
    %v934 = vpop.f32.mrb[0].mxu0
    %v935 = vadd.f32 0.0, %v934
    %v936 = vpop.f32.mrb[0].mxu0
    %937 = vdwg.mxu0
    %939 = vrot.lane.b32.xlu0 %v360, 112
    %v940 = vpop.permute.xlu0 %939
    %v943 = vsel %vm516, %v854, 0
    %945 = vmatprep.subr.mxu0 0.0
    %946 = vmatpush1.msra.mxu0 %v940
    %947 = vmatprep.subr.mxu0 0.0
    %948 = vmatpush1.msra.mxu0 0.0
    %949 = vmatprep.subr.mxu0 0.0
    %950 = vmatpush1.msra.mxu0 0.0
    %951 = vmatprep.subr.mxu0 0.0
    %952 = vmatpush1.msra.mxu0 0.0
    %953 = vmatprep.subr.mxu0 0.0
    %954 = vmatpush1.msra.mxu0 0.0
    %955 = vmatprep.subr.mxu0 0.0
    %956 = vmatpush1.msra.mxu0 0.0
    %957 = vmatprep.subr.mxu0 0.0
    %958 = vmatpush1.msra.mxu0 0.0
    %959 = vmatprep.subr.mxu0 0.0
    %960 = vmatpush1.msra.mxu0 0.0
    %961 = vmatprep.subr.mxu0 0.0
    %962 = vmatpush1.msra.mxu0 0.0
    %963 = vmatprep.subr.mxu0 0.0
    %964 = vmatpush1.msra.mxu0 0.0
    %965 = vmatprep.subr.mxu0 0.0
    %966 = vmatpush1.msra.mxu0 0.0
    %967 = vmatprep.subr.mxu0 0.0
    %968 = vmatpush1.msra.mxu0 0.0
    %969 = vmatprep.subr.mxu0 0.0
    %970 = vmatpush1.msra.mxu0 0.0
    %971 = vmatprep.subr.mxu0 0.0
    %972 = vmatpush1.msra.mxu0 0.0
    %973 = vmatprep.subr.mxu0 0.0
    %974 = vmatpush1.msra.mxu0 0.0
    %975 = vmatprep.subr.mxu0 0.0
    %976 = vmatpush1.msra.mxu0 0.0
    %977 = vmatprep.subr.mxu0 0.0
    %978 = vmatpush1.msra.mxu0 0.0
    %979 = vmatprep.subr.mxu0 0.0
    %980 = vmatpush1.msra.mxu0 0.0
    %981 = vmatprep.subr.mxu0 0.0
    %982 = vmatpush1.msra.mxu0 0.0
    %983 = vmatprep.subr.mxu0 0.0
    %984 = vmatpush1.msra.mxu0 0.0
    %985 = vmatprep.subr.mxu0 0.0
    %986 = vmatpush1.msra.mxu0 0.0
    %987 = vmatprep.subr.mxu0 0.0
    %988 = vmatpush1.msra.mxu0 0.0
    %989 = vmatprep.subr.mxu0 0.0
    %990 = vmatpush1.msra.mxu0 0.0
    %991 = vmatprep.subr.mxu0 0.0
    %992 = vmatpush1.msra.mxu0 0.0
    %993 = vmatprep.subr.mxu0 0.0
    %994 = vmatpush1.msra.mxu0 0.0
    %995 = vmatprep.subr.mxu0 0.0
    %996 = vmatpush1.msra.mxu0 0.0
    %997 = vmatprep.subr.mxu0 0.0
    %998 = vmatpush1.msra.mxu0 0.0
    %999 = vmatprep.subr.mxu0 0.0
    %1000 = vmatpush1.msra.mxu0 0.0
    %1001 = vmatprep.subr.mxu0 0.0
    %1002 = vmatpush1.msra.mxu0 0.0
    %1003 = vmatprep.subr.mxu0 0.0
    %1004 = vmatpush1.msra.mxu0 0.0
    %1005 = vmatprep.subr.mxu0 0.0
    %1006 = vmatpush1.msra.mxu0 0.0
    %1007 = vmatprep.subr.mxu0 0.0
    %1008 = vmatpush1.msra.mxu0 0.0
    %1009 = vmatprep.mubr.f32.mxu0 0.0
    %1010 = vmatmul.mubr.f32.gmra.mrb[0].mxu0 %v943
    %v1011 = vpop.f32.mrb[0].mxu0
    %v1012 = vadd.f32 0.0, %v1011
    %v1013 = vpop.f32.mrb[0].mxu0
    %1014 = vdwg.mxu0
    %v1015 = vrcp.pop %v857
    %v1016 = vmul.f32 %v935, %v1015
    %v1017 = vrcp.pop %v860
    %v1018 = vmul.f32 %v1012, %v1017
    %1021 = vrot.lane.b32.xlu0 %v1016, 16
    %v1022 = vpop.permute.xlu0 %1021
    %1023 = vrot.lane.b32.xlu0 %v1018, 16
    %v1024 = vpop.permute.xlu0 %1023
    %vm1027 = vcmask 261248
    %1028 = vst.msk [vmem:[#allocation2] sm:$0xff] %vm1027, %v1022
    %1029 = vst.msk [vmem:[#allocation2 + $0x8] sm:$0xff] %vm1027, %v1024
    %v1030 = vld [vmem:[#allocation2] sm:$0xff]
    %v1031 = vld [vmem:[#allocation2 + $0x8] sm:$0xff]
    %v1032 = vld [vmem:[#allocation12] sm:$0xff]
    %v1033 = vld [vmem:[#allocation12 + $0x8] sm:$0xff]
    %v1034 = vld [vmem:[#allocation12 + $0x10] sm:$0xff]
    %v1035 = vld [vmem:[#allocation12 + $0x18] sm:$0xff]
    %v1036 = vld [vmem:[%s6] sm:$0x1]
    %v1038 = vlaneseq
    %v1039 = vshrl.u32 %v1038, 7
    %v1040 = vsub.s32 0, %v1039
    %v1041 = vrot.slane %v1036, %v1040
    %v1044 = vsel %vm117, %v1030, 0
    %v1047 = vsel %vm117, %v1031, 0
    %1049 = vmatprep.subr.mxu0 0.0
    %1050 = vmatpush1.msra.mxu0 %v1032
    %1051 = vmatprep.subr.mxu0 0.0
    %1052 = vmatpush1.msra.mxu0 %v1033
    %1053 = vmatprep.subr.mxu0 0.0
    %1054 = vmatpush1.msra.mxu0 %v1034
    %1055 = vmatprep.subr.mxu0 0.0
    %1056 = vmatpush1.msra.mxu0 %v1035
    %1057 = vmatprep.subr.mxu0 0.0
    %1058 = vmatpush1.msra.mxu0 0.0
    %1059 = vmatprep.subr.mxu0 0.0
    %1060 = vmatpush1.msra.mxu0 0.0
    %1061 = vmatprep.subr.mxu0 0.0
    %1062 = vmatpush1.msra.mxu0 0.0
    %1063 = vmatprep.subr.mxu0 0.0
    %1064 = vmatpush1.msra.mxu0 0.0
    %1065 = vmatprep.subr.mxu0 0.0
    %1066 = vmatpush1.msra.mxu0 0.0
    %1067 = vmatprep.subr.mxu0 0.0
    %1068 = vmatpush1.msra.mxu0 0.0
    %1069 = vmatprep.subr.mxu0 0.0
    %1070 = vmatpush1.msra.mxu0 0.0
    %1071 = vmatprep.subr.mxu0 0.0
    %1072 = vmatpush1.msra.mxu0 0.0
    %1073 = vmatprep.subr.mxu0 0.0
    %1074 = vmatpush1.msra.mxu0 0.0
    %1075 = vmatprep.subr.mxu0 0.0
    %1076 = vmatpush1.msra.mxu0 0.0
    %1077 = vmatprep.subr.mxu0 0.0
    %1078 = vmatpush1.msra.mxu0 0.0
    %1079 = vmatprep.subr.mxu0 0.0
    %1080 = vmatpush1.msra.mxu0 0.0
    %1081 = vmatprep.subr.mxu0 0.0
    %1082 = vmatpush1.msra.mxu0 0.0
    %1083 = vmatprep.subr.mxu0 0.0
    %1084 = vmatpush1.msra.mxu0 0.0
    %1085 = vmatprep.subr.mxu0 0.0
    %1086 = vmatpush1.msra.mxu0 0.0
    %1087 = vmatprep.subr.mxu0 0.0
    %1088 = vmatpush1.msra.mxu0 0.0
    %1089 = vmatprep.subr.mxu0 0.0
    %1090 = vmatpush1.msra.mxu0 0.0
    %1091 = vmatprep.subr.mxu0 0.0
    %1092 = vmatpush1.msra.mxu0 0.0
    %1093 = vmatprep.subr.mxu0 0.0
    %1094 = vmatpush1.msra.mxu0 0.0
    %1095 = vmatprep.subr.mxu0 0.0
    %1096 = vmatpush1.msra.mxu0 0.0
    %1097 = vmatprep.subr.mxu0 0.0
    %1098 = vmatpush1.msra.mxu0 0.0
    %1099 = vmatprep.subr.mxu0 0.0
    %1100 = vmatpush1.msra.mxu0 0.0
    %1101 = vmatprep.subr.mxu0 0.0
    %1102 = vmatpush1.msra.mxu0 0.0
    %1103 = vmatprep.subr.mxu0 0.0
    %1104 = vmatpush1.msra.mxu0 0.0
    %1105 = vmatprep.subr.mxu0 0.0
    %1106 = vmatpush1.msra.mxu0 0.0
    %1107 = vmatprep.subr.mxu0 0.0
    %1108 = vmatpush1.msra.mxu0 0.0
    %1109 = vmatprep.subr.mxu0 0.0
    %1110 = vmatpush1.msra.mxu0 0.0
    %1111 = vmatprep.subr.mxu0 0.0
    %1112 = vmatpush1.msra.mxu0 0.0
    %1113 = vmatprep.mubr.f32.mxu0 0.0
    %1114 = vmatmul.mubr.f32.gmra.mrb[0].mxu0 %v1044
    %v1115 = vpop.f32.mrb[0].mxu0
    %v1116 = vadd.f32 %v1041, %v1115
    %v1117 = vpop.f32.mrb[0].mxu0
    %1118 = vmatprep.mubr.f32.mxu0 0.0
    %1119 = vmatmul.mubr.f32.gmra.mrb[0].mxu0 %v1047
    %v1120 = vpop.f32.mrb[0].mxu0
    %v1121 = vadd.f32 %v1041, %v1120
    %v1122 = vpop.f32.mrb[0].mxu0
    %1123 = vdwg.mxu0
    %1124 = vst.msk [vmem:[#allocation14] sm:$0xff] %vm117, %v1116
    %1125 = vst.msk [vmem:[#allocation14 + $0x8] sm:$0xff] %vm117, %v1121
    // Predicated region
    $region54: #{tpu_custom_call.1} parent=1 // pred_check
      _
    $region55: #{tpu_custom_call.1} parent=1 // pred_check_branch
      %1127 = sbr.rel (0) target = $region57
    $region56: #{tpu_custom_call.1} parent=1 // pred_region
      %s1129 = ssub.s32 256, 256
      %1130 = vsyncadd [#allocation5], %s1129
      %s1131 = sshll.u32 [#allocation14], 4
      %s1132 = int_to_ptr.vmem [resolvable:$true] %s1131
      %1137 = dma.vmem_to_hbm [thread:$0]  %s1132, 256, %s7, [#allocation5], 128, 128, 8
    $region57: #{tpu_custom_call.1} parent=1 // pred_fallthru
      _
    // Predicated region
    $region58: #{tpu_custom_call.1} parent=1 // pred_check
      _
    $region59: #{tpu_custom_call.1} parent=1 // pred_check_branch
      %1139 = sbr.rel (0) target = $region61
    $region60: #{tpu_custom_call.1} parent=1 // pred_region
      %1140 = dma.done [#allocation5], 256
    $region61: #{tpu_custom_call.1} parent=1 // pred_fallthru
      _
    %1141 = vsyncpa [#allocation4], 1
    %1142 = vsyncpa [#allocation7], 1
    %1143 = vsyncpa [#allocation10], 1
    %1144 = vsyncpa [#allocation13], 1
    %1145 = vsyncpa [#allocation5], 1

</llo_original>
